<compile_context>
chip_gen: v5e
topology: v5e:2x2
jax: 0.10.0
libtpu: 0.0.40
codegen_flags: <defaults>
</compile_context>

<pallas_src>
import numpy as np
import jax
import jax.numpy as jnp
from jax import lax
from jax.experimental import pallas as pl
from jax.experimental.pallas import tpu as pltpu


def sheaf_conv_kernel(row_ref, col_ref, ridx_ref,        # SMEM int32 (E,)
                      x_ref, w12_ref, wlt_ref, b_ref,    # VMEM f32 inputs
                      o_ref,                             # VMEM f32 (N, d) output
                      s0_ref, s1_ref, y_ref, maps_ref,   # VMEM scratch
                      diag_ref, dinv_ref, acc_ref):
    n_nodes, d = x_ref.shape
    n_edges = maps_ref.shape[0]

    x = x_ref[...]                                   # (N, d)
    w1 = w12_ref[0:1, :]                             # (1, d)  sheaf weights on x[row]
    w2 = w12_ref[1:2, :]                             # (1, d)  sheaf weights on x[col]

    # --- per-node sheaf-learner pre-activations (vectorized, VPU only) ------
    s0_ref[...] = jnp.sum(x * w1, axis=1, keepdims=True)   # (N, 1) = x . w1
    s1_ref[...] = jnp.sum(x * w2, axis=1, keepdims=True)   # (N, 1) = x . w2

    # --- y = Linear(x) = x @ Wl^T + b, as d rank-1 updates (d is tiny/static) -
    y = jnp.broadcast_to(b_ref[...], (n_nodes, d))
    for k in range(d):
        y = y + x[:, k:k + 1] * wlt_ref[k:k + 1, :]
    y_ref[...] = y

    diag_ref[...] = jnp.zeros_like(diag_ref)
    acc_ref[...] = jnp.zeros_like(acc_ref)

    # --- pass A: restriction map per edge + scatter-add of maps^2 onto rows --
    def edge_maps(e, carry):
        r = row_ref[e]
        c = col_ref[e]
        m = jnp.tanh(s0_ref[pl.ds(r, 1), :] + s1_ref[pl.ds(c, 1), :])   # (1, 1)
        maps_ref[pl.ds(e, 1), :] = m
        diag_ref[pl.ds(r, 1), :] = diag_ref[pl.ds(r, 1), :] + m * m
        return carry

    lax.fori_loop(0, n_edges, edge_maps, 0)

    dinv_ref[...] = lax.rsqrt(diag_ref[...] + 1.0)          # (diag_maps + 1)^-0.5

    # --- pass B: off-diagonal Laplacian action, scatter-added per source node
    # norm_maps_e = dinv[row] * (-maps_e * maps_rev_e) * dinv[col]
    # out[row]   -= norm_maps_e * y[col]   <=>   acc[row] += (dinv_r*m*m_rev*dinv_c) * y[col]
    def edge_apply(e, carry):
        r = row_ref[e]
        c = col_ref[e]
        ri = ridx_ref[e]
        m = maps_ref[pl.ds(e, 1), :]
        m_rev = maps_ref[pl.ds(ri, 1), :]
        w = dinv_ref[pl.ds(r, 1), :] * (m * m_rev) * dinv_ref[pl.ds(c, 1), :]
        acc_ref[pl.ds(r, 1), :] = acc_ref[pl.ds(r, 1), :] + w * y_ref[pl.ds(c, 1), :]
        return carry

    lax.fori_loop(0, n_edges, edge_apply, 0)

    # --- out = x - step_size * (Laplacian @ y), step_size = 1.0 --------------
    dinv = dinv_ref[...]
    diag = dinv * diag_ref[...] * dinv                       # (N, 1)
    o_ref[...] = x - diag * y_ref[...] + acc_ref[...]


def compute_right_index(row_np, col_np):
    """Same host-side dict pairing as PyTorch compute_left_right_map_index."""
    e2i = {(int(s), int(t)): e for e, (s, t) in enumerate(zip(row_np, col_np))}
    return np.array([e2i[(int(t), int(s))] for s, t in zip(row_np, col_np)],
                    dtype=np.int32)


def sheaf_conv_forward(embeddings, edge_index, sheaf_w, lin_w, lin_b):
    """embeddings: (N, d) f32; edge_index: (2, E) int (reverse of every edge present,
    as the original PyTorch module requires)."""
    N, d = embeddings.shape
    edge_np = np.asarray(edge_index)
    row_np, col_np = edge_np[0], edge_np[1]
    E = int(row_np.shape[0])
    ridx_np = compute_right_index(row_np, col_np)

    row = jnp.asarray(row_np, dtype=jnp.int32)
    col = jnp.asarray(col_np, dtype=jnp.int32)
    ridx = jnp.asarray(ridx_np, dtype=jnp.int32)

    # pack sheaf-learner weight (1, 2d) -> (2, d): row0 acts on x[row], row1 on x[col]
    w12 = jnp.concatenate([sheaf_w[:, :d], sheaf_w[:, d:]], axis=0).astype(jnp.float32)
    wlt = lin_w.T.astype(jnp.float32)                 # (d, d): y = x @ wlt + b
    b = lin_b.reshape(1, d).astype(jnp.float32)

    smem = pl.BlockSpec(memory_space=pltpu.MemorySpace.SMEM)
    vmem = pl.BlockSpec(memory_space=pltpu.MemorySpace.VMEM)
    return pl.pallas_call(
        sheaf_conv_kernel,
        out_shape=jax.ShapeDtypeStruct((N, d), jnp.float32),
        in_specs=[smem, smem, smem, vmem, vmem, vmem, vmem],
        out_specs=vmem,
        scratch_shapes=[
            pltpu.VMEM((N, 1), jnp.float32),   # s0 = x . w1
            pltpu.VMEM((N, 1), jnp.float32),   # s1 = x . w2
            pltpu.VMEM((N, d), jnp.float32),   # y = Linear(x)
            pltpu.VMEM((E, 1), jnp.float32),   # restriction map per edge
            pltpu.VMEM((N, 1), jnp.float32),   # diag_maps
            pltpu.VMEM((N, 1), jnp.float32),   # d^{-1/2}
            pltpu.VMEM((N, d), jnp.float32),   # off-diagonal accumulator
        ],
    )(row, col, ridx, embeddings.astype(jnp.float32), w12, wlt, b)


def reference_forward(embeddings, edge_index, sheaf_w, lin_w, lin_b):
    """Plain-JAX port mirroring the PyTorch module (for verification)."""
    N = embeddings.shape[0]
    row = np.asarray(edge_index[0])
    col = np.asarray(edge_index[1])
    right_idx = compute_right_index(row, col)

    x_row = embeddings[row]
    x_col = embeddings[col]
    maps = jnp.tanh(jnp.concatenate([x_row, x_col], axis=1) @ sheaf_w.T)  # (E, 1)
    non_diag = -maps * maps[right_idx]
    diag_maps = jax.ops.segment_sum((maps ** 2)[:, 0], row, num_segments=N)[:, None]
    dinv = (diag_maps + 1.0) ** -0.5
    norm_maps = dinv[row] * non_diag * dinv[col]
    diag = dinv * diag_maps * dinv
    y = embeddings @ lin_w.T + lin_b
    Ly = diag * y + jax.ops.segment_sum(norm_maps * y[col], row, num_segments=N)
    return embeddings - Ly


if __name__ == "__main__":
    N = 16            # num_nodes
    d = 3             # latent_dim

    key = jax.random.PRNGKey(0)
    k_x, k_sheaf, k_lin, k_bias = jax.random.split(key, 4)

    embeddings = jax.random.normal(k_x, (N, d), jnp.float32)

    # symmetric ring graph: each node connected to both neighbours -> E = 2N
    idx = np.arange(N)
    row_np = np.concatenate([idx, idx])
    col_np = np.concatenate([(idx + 1) % N, (idx - 1) % N])
    edge_index = jnp.asarray(np.stack([row_np, col_np]), dtype=jnp.int32)  # (2, 32)

    # deterministic parameters (init_parameters: normal with std=0.1)
    sheaf_w = 0.1 * jax.random.normal(k_sheaf, (1, 2 * d), jnp.float32)  # sheaf_learner.weight
    lin_w = 0.1 * jax.random.normal(k_lin, (d, d), jnp.float32)          # linear.weight
    lin_b = 0.1 * jax.random.normal(k_bias, (d,), jnp.float32)           # linear.bias

    out = sheaf_conv_forward(embeddings, edge_index, sheaf_w, lin_w, lin_b)
    out = jax.block_until_ready(out)

    ref = reference_forward(embeddings, edge_index, sheaf_w, lin_w, lin_b)
    np.testing.assert_allclose(np.asarray(out), np.asarray(ref), atol=2e-3, rtol=2e-3)
    print("KERNEL_OK")
</pallas_src>

<mosaic_0001>
module attributes {stable_mosaic.version = 11 : i64} {
  func.func @sheaf_conv_kernel(%arg0: memref<32xi32, #tpu.memory_space<smem>>, %arg1: memref<32xi32, #tpu.memory_space<smem>>, %arg2: memref<32xi32, #tpu.memory_space<smem>>, %arg3: memref<16x3xf32, #tpu.memory_space<vmem>>, %arg4: memref<2x3xf32, #tpu.memory_space<vmem>>, %arg5: memref<3x3xf32, #tpu.memory_space<vmem>>, %arg6: memref<1x3xf32, #tpu.memory_space<vmem>>, %arg7: memref<16x3xf32, #tpu.memory_space<vmem>>, %arg8: memref<16x1xf32, #tpu.memory_space<vmem>>, %arg9: memref<16x1xf32, #tpu.memory_space<vmem>>, %arg10: memref<16x3xf32, #tpu.memory_space<vmem>>, %arg11: memref<32x1xf32, #tpu.memory_space<vmem>>, %arg12: memref<16x1xf32, #tpu.memory_space<vmem>>, %arg13: memref<16x1xf32, #tpu.memory_space<vmem>>, %arg14: memref<16x3xf32, #tpu.memory_space<vmem>>) attributes {dimension_semantics = [], scalar_prefetch = 0 : i64, scratch_operands = 7 : i64, tpu.core_type = #tpu.core_type<tc>} {
    %c0 = arith.constant 0 : index
    %c0_0 = arith.constant 0 : index
    %0 = vector.load %arg3[%c0, %c0_0] : memref<16x3xf32, #tpu.memory_space<vmem>>, vector<16x3xf32>
    %c0_1 = arith.constant 0 : index
    %c0_2 = arith.constant 0 : index
    %1 = vector.load %arg4[%c0_1, %c0_2] : memref<2x3xf32, #tpu.memory_space<vmem>>, vector<1x3xf32>
    %c1 = arith.constant 1 : index
    %c0_3 = arith.constant 0 : index
    %2 = vector.load %arg4[%c1, %c0_3] : memref<2x3xf32, #tpu.memory_space<vmem>>, vector<1x3xf32>
    %3 = vector.broadcast %1 : vector<1x3xf32> to vector<16x3xf32>
    %4 = arith.mulf %0, %3 : vector<16x3xf32>
    %cst = arith.constant dense<0.000000e+00> : vector<16xf32>
    %5 = vector.multi_reduction <add>, %4, %cst [1] : vector<16x3xf32> to vector<16xf32>
    %6 = vector.shape_cast %5 : vector<16xf32> to vector<16x1xf32>
    %c0_4 = arith.constant 0 : index
    %c0_5 = arith.constant 0 : index
    %7 = vector.load %arg8[%c0_4, %c0_5] : memref<16x1xf32, #tpu.memory_space<vmem>>, vector<16x1xf32>
    tpu.vector_store %arg8[%c0_4, %c0_5], %6 {strides = array<i32>} : memref<16x1xf32, #tpu.memory_space<vmem>>, vector<16x1xf32>,
    %8 = vector.broadcast %2 : vector<1x3xf32> to vector<16x3xf32>
    %9 = arith.mulf %0, %8 : vector<16x3xf32>
    %cst_6 = arith.constant dense<0.000000e+00> : vector<16xf32>
    %10 = vector.multi_reduction <add>, %9, %cst_6 [1] : vector<16x3xf32> to vector<16xf32>
    %11 = vector.shape_cast %10 : vector<16xf32> to vector<16x1xf32>
    %c0_7 = arith.constant 0 : index
    %c0_8 = arith.constant 0 : index
    %12 = vector.load %arg9[%c0_7, %c0_8] : memref<16x1xf32, #tpu.memory_space<vmem>>, vector<16x1xf32>
    tpu.vector_store %arg9[%c0_7, %c0_8], %11 {strides = array<i32>} : memref<16x1xf32, #tpu.memory_space<vmem>>, vector<16x1xf32>,
    %c0_9 = arith.constant 0 : index
    %c0_10 = arith.constant 0 : index
    %13 = vector.load %arg6[%c0_9, %c0_10] : memref<1x3xf32, #tpu.memory_space<vmem>>, vector<1x3xf32>
    %14 = vector.shape_cast %13 : vector<1x3xf32> to vector<1x3xf32>
    %15 = vector.broadcast %14 : vector<1x3xf32> to vector<16x3xf32>
    %16 = vector.extract_strided_slice %0 {offsets = [0, 0], sizes = [16, 1], strides = [1, 1]} : vector<16x3xf32> to vector<16x1xf32>
    %c0_11 = arith.constant 0 : index
    %c0_12 = arith.constant 0 : index
    %17 = vector.load %arg5[%c0_11, %c0_12] : memref<3x3xf32, #tpu.memory_space<vmem>>, vector<1x3xf32>
    %18 = vector.broadcast %16 : vector<16x1xf32> to vector<16x3xf32>
    %19 = vector.broadcast %17 : vector<1x3xf32> to vector<16x3xf32>
    %20 = arith.mulf %18, %19 : vector<16x3xf32>
    %21 = arith.addf %15, %20 : vector<16x3xf32>
    %22 = vector.extract_strided_slice %0 {offsets = [0, 1], sizes = [16, 1], strides = [1, 1]} : vector<16x3xf32> to vector<16x1xf32>
    %c1_13 = arith.constant 1 : index
    %c0_14 = arith.constant 0 : index
    %23 = vector.load %arg5[%c1_13, %c0_14] : memref<3x3xf32, #tpu.memory_space<vmem>>, vector<1x3xf32>
    %24 = vector.broadcast %22 : vector<16x1xf32> to vector<16x3xf32>
    %25 = vector.broadcast %23 : vector<1x3xf32> to vector<16x3xf32>
    %26 = arith.mulf %24, %25 : vector<16x3xf32>
    %27 = arith.addf %21, %26 : vector<16x3xf32>
    %28 = vector.extract_strided_slice %0 {offsets = [0, 2], sizes = [16, 1], strides = [1, 1]} : vector<16x3xf32> to vector<16x1xf32>
    %c2 = arith.constant 2 : index
    %c0_15 = arith.constant 0 : index
    %29 = vector.load %arg5[%c2, %c0_15] : memref<3x3xf32, #tpu.memory_space<vmem>>, vector<1x3xf32>
    %30 = vector.broadcast %28 : vector<16x1xf32> to vector<16x3xf32>
    %31 = vector.broadcast %29 : vector<1x3xf32> to vector<16x3xf32>
    %32 = arith.mulf %30, %31 : vector<16x3xf32>
    %33 = arith.addf %27, %32 : vector<16x3xf32>
    %c0_16 = arith.constant 0 : index
    %c0_17 = arith.constant 0 : index
    %34 = vector.load %arg10[%c0_16, %c0_17] : memref<16x3xf32, #tpu.memory_space<vmem>>, vector<16x3xf32>
    tpu.vector_store %arg10[%c0_16, %c0_17], %33 {strides = array<i32>} : memref<16x3xf32, #tpu.memory_space<vmem>>, vector<16x3xf32>,
    %cst_18 = arith.constant 0.000000e+00 : f32
    %35 = vector.broadcast %cst_18 : f32 to vector<16x1xf32>
    %c0_19 = arith.constant 0 : index
    %c0_20 = arith.constant 0 : index
    %36 = vector.load %arg12[%c0_19, %c0_20] : memref<16x1xf32, #tpu.memory_space<vmem>>, vector<16x1xf32>
    tpu.vector_store %arg12[%c0_19, %c0_20], %35 {strides = array<i32>} : memref<16x1xf32, #tpu.memory_space<vmem>>, vector<16x1xf32>,
    %cst_21 = arith.constant 0.000000e+00 : f32
    %37 = vector.broadcast %cst_21 : f32 to vector<16x3xf32>
    %c0_22 = arith.constant 0 : index
    %c0_23 = arith.constant 0 : index
    %38 = vector.load %arg14[%c0_22, %c0_23] : memref<16x3xf32, #tpu.memory_space<vmem>>, vector<16x3xf32>
    tpu.vector_store %arg14[%c0_22, %c0_23], %37 {strides = array<i32>} : memref<16x3xf32, #tpu.memory_space<vmem>>, vector<16x3xf32>,
    %c0_i32 = arith.constant 0 : i32
    %c32_i32 = arith.constant 32 : i32
    %39 = arith.addi %c0_i32, %c32_i32 : i32
    %c1_i32 = arith.constant 1 : i32
    scf.for %arg15 = %c0_i32 to %39 step %c1_i32  : i32 {
      %57 = arith.index_cast %arg15 : i32 to index
      %58 = memref.load %arg0[%57] : memref<32xi32, #tpu.memory_space<smem>>
      %59 = arith.index_cast %arg15 : i32 to index
      %60 = memref.load %arg1[%59] : memref<32xi32, #tpu.memory_space<smem>>
      %61 = arith.index_cast %58 : i32 to index
      %c0_44 = arith.constant 0 : index
      %62 = vector.load %arg8[%61, %c0_44] : memref<16x1xf32, #tpu.memory_space<vmem>>, vector<1x1xf32>
      %63 = arith.index_cast %60 : i32 to index
      %c0_45 = arith.constant 0 : index
      %64 = vector.load %arg9[%63, %c0_45] : memref<16x1xf32, #tpu.memory_space<vmem>>, vector<1x1xf32>
      %65 = arith.addf %62, %64 : vector<1x1xf32>
      %66 = math.tanh %65 : vector<1x1xf32>
      %67 = arith.index_cast %arg15 : i32 to index
      %c0_46 = arith.constant 0 : index
      %68 = vector.load %arg11[%67, %c0_46] : memref<32x1xf32, #tpu.memory_space<vmem>>, vector<1x1xf32>
      tpu.vector_store %arg11[%67, %c0_46], %66 {strides = array<i32>} : memref<32x1xf32, #tpu.memory_space<vmem>>, vector<1x1xf32>,
      %69 = arith.index_cast %58 : i32 to index
      %c0_47 = arith.constant 0 : index
      %70 = vector.load %arg12[%69, %c0_47] : memref<16x1xf32, #tpu.memory_space<vmem>>, vector<1x1xf32>
      %71 = arith.mulf %66, %66 : vector<1x1xf32>
      %72 = arith.addf %70, %71 : vector<1x1xf32>
      %73 = arith.index_cast %58 : i32 to index
      %c0_48 = arith.constant 0 : index
      %74 = vector.load %arg12[%73, %c0_48] : memref<16x1xf32, #tpu.memory_space<vmem>>, vector<1x1xf32>
      tpu.vector_store %arg12[%73, %c0_48], %72 {strides = array<i32>} : memref<16x1xf32, #tpu.memory_space<vmem>>, vector<1x1xf32>,
    }
    %c32_i32_24 = arith.constant 32 : i32
    %c0_25 = arith.constant 0 : index
    %c0_26 = arith.constant 0 : index
    %40 = vector.load %arg12[%c0_25, %c0_26] : memref<16x1xf32, #tpu.memory_space<vmem>>, vector<16x1xf32>
    %cst_27 = arith.constant 1.000000e+00 : f32
    %41 = vector.broadcast %cst_27 : f32 to vector<16x1xf32>
    %42 = arith.addf %40, %41 : vector<16x1xf32>
    %43 = math.rsqrt %42 : vector<16x1xf32>
    %c0_28 = arith.constant 0 : index
    %c0_29 = arith.constant 0 : index
    %44 = vector.load %arg13[%c0_28, %c0_29] : memref<16x1xf32, #tpu.memory_space<vmem>>, vector<16x1xf32>
    tpu.vector_store %arg13[%c0_28, %c0_29], %43 {strides = array<i32>} : memref<16x1xf32, #tpu.memory_space<vmem>>, vector<16x1xf32>,
    %c0_i32_30 = arith.constant 0 : i32
    %c32_i32_31 = arith.constant 32 : i32
    %45 = arith.addi %c0_i32_30, %c32_i32_31 : i32
    %c1_i32_32 = arith.constant 1 : i32
    scf.for %arg15 = %c0_i32_30 to %45 step %c1_i32_32  : i32 {
      %57 = arith.index_cast %arg15 : i32 to index
      %58 = memref.load %arg0[%57] : memref<32xi32, #tpu.memory_space<smem>>
      %59 = arith.index_cast %arg15 : i32 to index
      %60 = memref.load %arg1[%59] : memref<32xi32, #tpu.memory_space<smem>>
      %61 = arith.index_cast %arg15 : i32 to index
      %62 = memref.load %arg2[%61] : memref<32xi32, #tpu.memory_space<smem>>
      %63 = arith.index_cast %arg15 : i32 to index
      %c0_44 = arith.constant 0 : index
      %64 = vector.load %arg11[%63, %c0_44] : memref<32x1xf32, #tpu.memory_space<vmem>>, vector<1x1xf32>
      %65 = arith.index_cast %62 : i32 to index
      %c0_45 = arith.constant 0 : index
      %66 = vector.load %arg11[%65, %c0_45] : memref<32x1xf32, #tpu.memory_space<vmem>>, vector<1x1xf32>
      %67 = arith.index_cast %58 : i32 to index
      %c0_46 = arith.constant 0 : index
      %68 = vector.load %arg13[%67, %c0_46] : memref<16x1xf32, #tpu.memory_space<vmem>>, vector<1x1xf32>
      %69 = arith.mulf %64, %66 : vector<1x1xf32>
      %70 = arith.mulf %68, %69 : vector<1x1xf32>
      %71 = arith.index_cast %60 : i32 to index
      %c0_47 = arith.constant 0 : index
      %72 = vector.load %arg13[%71, %c0_47] : memref<16x1xf32, #tpu.memory_space<vmem>>, vector<1x1xf32>
      %73 = arith.mulf %70, %72 : vector<1x1xf32>
      %74 = arith.index_cast %58 : i32 to index
      %c0_48 = arith.constant 0 : index
      %75 = vector.load %arg14[%74, %c0_48] : memref<16x3xf32, #tpu.memory_space<vmem>>, vector<1x3xf32>
      %76 = arith.index_cast %60 : i32 to index
      %c0_49 = arith.constant 0 : index
      %77 = vector.load %arg10[%76, %c0_49] : memref<16x3xf32, #tpu.memory_space<vmem>>, vector<1x3xf32>
      %78 = vector.broadcast %73 : vector<1x1xf32> to vector<1x3xf32>
      %79 = arith.mulf %78, %77 : vector<1x3xf32>
      %80 = arith.addf %75, %79 : vector<1x3xf32>
      %81 = arith.index_cast %58 : i32 to index
      %c0_50 = arith.constant 0 : index
      %82 = vector.load %arg14[%81, %c0_50] : memref<16x3xf32, #tpu.memory_space<vmem>>, vector<1x3xf32>
      tpu.vector_store %arg14[%81, %c0_50], %80 {strides = array<i32>} : memref<16x3xf32, #tpu.memory_space<vmem>>, vector<1x3xf32>,
    }
    %c32_i32_33 = arith.constant 32 : i32
    %c0_34 = arith.constant 0 : index
    %c0_35 = arith.constant 0 : index
    %46 = vector.load %arg13[%c0_34, %c0_35] : memref<16x1xf32, #tpu.memory_space<vmem>>, vector<16x1xf32>
    %c0_36 = arith.constant 0 : index
    %c0_37 = arith.constant 0 : index
    %47 = vector.load %arg12[%c0_36, %c0_37] : memref<16x1xf32, #tpu.memory_space<vmem>>, vector<16x1xf32>
    %48 = arith.mulf %46, %47 : vector<16x1xf32>
    %49 = arith.mulf %48, %46 : vector<16x1xf32>
    %c0_38 = arith.constant 0 : index
    %c0_39 = arith.constant 0 : index
    %50 = vector.load %arg10[%c0_38, %c0_39] : memref<16x3xf32, #tpu.memory_space<vmem>>, vector<16x3xf32>
    %51 = vector.broadcast %49 : vector<16x1xf32> to vector<16x3xf32>
    %52 = arith.mulf %51, %50 : vector<16x3xf32>
    %53 = arith.subf %0, %52 : vector<16x3xf32>
    %c0_40 = arith.constant 0 : index
    %c0_41 = arith.constant 0 : index
    %54 = vector.load %arg14[%c0_40, %c0_41] : memref<16x3xf32, #tpu.memory_space<vmem>>, vector<16x3xf32>
    %55 = arith.addf %53, %54 : vector<16x3xf32>
    %c0_42 = arith.constant 0 : index
    %c0_43 = arith.constant 0 : index
    %56 = vector.load %arg7[%c0_42, %c0_43] : memref<16x3xf32, #tpu.memory_space<vmem>>, vector<16x3xf32>
    tpu.vector_store %arg7[%c0_42, %c0_43], %55 {strides = array<i32>} : memref<16x3xf32, #tpu.memory_space<vmem>>, vector<16x3xf32>,
    return
  }
}

</mosaic_0001>

<llo_original>
// kernel: tpu_custom_call.1
$region0: #{tpu_custom_call.1}
  #allocation0 [shape = 'u32[]', space=smem, size = 0x4, offset = 0x4, fixed_abs, tag = 'smem constant byte address 0x4 - core index']
  #allocation1 [shape = 'u32[72,128]{1,0:T(1,128)}', space=vmem, size = 0x9000, scoped, tag = 'internal scratch']
  #allocation2 [shape = 'f32[16,1]{1,0:T(8,128)}', space=vmem, size = 0x2000, scoped, tag = 'scratch operand']
  #allocation3 [shape = 'f32[16,1]{1,0:T(8,128)}', space=vmem, size = 0x2000, scoped, tag = 'scratch operand']
  #allocation4 [shape = 'f32[16,3]{1,0:T(8,128)}', space=vmem, size = 0x2000, scoped, tag = 'scratch operand']
  #allocation5 [shape = 'f32[32,1]{1,0:T(8,128)}', space=vmem, size = 0x4000, scoped, tag = 'scratch operand']
  #allocation6 [shape = 'f32[16,1]{1,0:T(8,128)}', space=vmem, size = 0x2000, scoped, tag = 'scratch operand']
  #allocation7 [shape = 'f32[16,1]{1,0:T(8,128)}', space=vmem, size = 0x2000, scoped, tag = 'scratch operand']
  #allocation8 [shape = 'f32[16,3]{1,0:T(8,128)}', space=vmem, size = 0x2000, scoped, tag = 'scratch operand']
  %s0 = inlined_call_operand.vmem [shape: s32[32], index: 0, kind: input, shape index: {}]
  %s1 = inlined_call_operand.vmem [shape: s32[32], index: 1, kind: input, shape index: {}]
  %s2 = inlined_call_operand.vmem [shape: s32[32], index: 2, kind: input, shape index: {}]
  %s3 = inlined_call_operand.vmem [shape: f32[16,3], index: 3, kind: input, shape index: {}]
  %s4 = inlined_call_operand.vmem [shape: f32[2,3], index: 4, kind: input, shape index: {}]
  %s5 = inlined_call_operand.vmem [shape: f32[3,3], index: 5, kind: input, shape index: {}]
  %s6 = inlined_call_operand.vmem [shape: f32[1,3], index: 6, kind: input, shape index: {}]
  %s7 = inlined_call_operand.vmem [shape: f32[16,3], index: 7, kind: output, shape index: {}]
  %s8 = sld [smem:[#allocation0]]
  $region64: #{tpu_custom_call.1} parent=0
    _
  %s10 = ssub.s32 1, %s8
  %s11 = scalar_select 0, %s10, %s8
  $region1: #{tpu_custom_call.1} parent=0
    #allocation9 [shape = 'u8[512]{0}', space=smem, size = 0x200, scoped, tag = 'input window, operand 0, single buffered']
    #allocation10 [shape = 's32[1]{0}', space=sflag, size = 0x4, scoped, tag = 'scoped memory for tpu_custom_call.1']
    #allocation11 [shape = 'u8[512]{0}', space=smem, size = 0x200, scoped, tag = 'input window, operand 1, single buffered']
    #allocation12 [shape = 's32[1]{0}', space=sflag, size = 0x4, scoped, tag = 'scoped memory for tpu_custom_call.1']
    #allocation13 [shape = 'u8[512]{0}', space=smem, size = 0x200, scoped, tag = 'input window, operand 2, single buffered']
    %12 = vsyncpa [#allocation10], 0
    %13 = vsyncpa [#allocation12], 0
    // Predicated region
    $region2: #{tpu_custom_call.1} parent=1 // pred_check
      _
    $region3: #{tpu_custom_call.1} parent=1 // pred_check_branch
      %15 = sbr.rel (0) target = $region5
    $region4: #{tpu_custom_call.1} parent=1 // pred_region
      %17 = vsyncadd [#allocation10], 0
      %s19 = sshll.u32 %s0, 4
      %s20 = int_to_ptr.vmem [resolvable:$true] %s19
      %22 = dma.vmem_to_smem %s20, 16, [#allocation9], [#allocation10]
    $region5: #{tpu_custom_call.1} parent=1 // pred_fallthru
      _
    // Predicated region
    $region6: #{tpu_custom_call.1} parent=1 // pred_check
      _
    $region7: #{tpu_custom_call.1} parent=1 // pred_check_branch
      %24 = sbr.rel (0) target = $region9
    $region8: #{tpu_custom_call.1} parent=1 // pred_region
      %26 = vsyncadd [#allocation12], 0
      %s28 = sshll.u32 %s1, 4
      %s29 = int_to_ptr.vmem [resolvable:$true] %s28
      %31 = dma.vmem_to_smem %s29, 16, [#allocation11], [#allocation12]
    $region9: #{tpu_custom_call.1} parent=1 // pred_fallthru
      _
    // Predicated region
    $region10: #{tpu_custom_call.1} parent=1 // pred_check
      _
    $region11: #{tpu_custom_call.1} parent=1 // pred_check_branch
      %33 = sbr.rel (0) target = $region13
    $region12: #{tpu_custom_call.1} parent=1 // pred_region
      %35 = vsyncadd [#allocation12], 0
      %s37 = sshll.u32 %s2, 4
      %s38 = int_to_ptr.vmem [resolvable:$true] %s37
      %40 = dma.vmem_to_smem %s38, 16, [#allocation13], [#allocation12]
    $region13: #{tpu_custom_call.1} parent=1 // pred_fallthru
      _
    // Predicated region
    $region14: #{tpu_custom_call.1} parent=1 // pred_check
      _
    $region15: #{tpu_custom_call.1} parent=1 // pred_check_branch
      %42 = sbr.rel (0) target = $region17
    $region16: #{tpu_custom_call.1} parent=1 // pred_region
      _
    $region17: #{tpu_custom_call.1} parent=1 // pred_fallthru
      _
    // Predicated region
    $region18: #{tpu_custom_call.1} parent=1 // pred_check
      _
    $region19: #{tpu_custom_call.1} parent=1 // pred_check_branch
      %44 = sbr.rel (0) target = $region21
    $region20: #{tpu_custom_call.1} parent=1 // pred_region
      _
    $region21: #{tpu_custom_call.1} parent=1 // pred_fallthru
      _
    // Predicated region
    $region22: #{tpu_custom_call.1} parent=1 // pred_check
      _
    $region23: #{tpu_custom_call.1} parent=1 // pred_check_branch
      %46 = sbr.rel (0) target = $region25
    $region24: #{tpu_custom_call.1} parent=1 // pred_region
      _
    $region25: #{tpu_custom_call.1} parent=1 // pred_fallthru
      _
    // Predicated region
    $region26: #{tpu_custom_call.1} parent=1 // pred_check
      _
    $region27: #{tpu_custom_call.1} parent=1 // pred_check_branch
      %48 = sbr.rel (0) target = $region29
    $region28: #{tpu_custom_call.1} parent=1 // pred_region
      _
    $region29: #{tpu_custom_call.1} parent=1 // pred_fallthru
      _
    // Predicated region
    $region30: #{tpu_custom_call.1} parent=1 // pred_check
      _
    $region31: #{tpu_custom_call.1} parent=1 // pred_check_branch
      %50 = sbr.rel (0) target = $region33
    $region32: #{tpu_custom_call.1} parent=1 // pred_region
      %52 = dma.done [#allocation10], 16
    $region33: #{tpu_custom_call.1} parent=1 // pred_fallthru
      _
    // Predicated region
    $region34: #{tpu_custom_call.1} parent=1 // pred_check
      _
    $region35: #{tpu_custom_call.1} parent=1 // pred_check_branch
      %54 = sbr.rel (0) target = $region37
    $region36: #{tpu_custom_call.1} parent=1 // pred_region
      %56 = dma.done [#allocation12], 16
    $region37: #{tpu_custom_call.1} parent=1 // pred_fallthru
      _
    // Predicated region
    $region38: #{tpu_custom_call.1} parent=1 // pred_check
      _
    $region39: #{tpu_custom_call.1} parent=1 // pred_check_branch
      %58 = sbr.rel (0) target = $region41
    $region40: #{tpu_custom_call.1} parent=1 // pred_region
      %60 = dma.done [#allocation12], 16
    $region41: #{tpu_custom_call.1} parent=1 // pred_fallthru
      _
    %61 = sfence
    %v62 = vld [vmem:[%s3] sm:$0xff]
    %v63 = vld [vmem:[%s3 + $0x8] sm:$0xff]
    %v64 = vld [vmem:[%s4] sm:$0x1]
    %v65 = vld [vmem:[%s4 + $0x1] sm:$0x1]
    %v66 = vperm.slane %v64, 0
    %v67 = vmul.f32 %v62, %v66
    %v68 = vmul.f32 %v63, %v66
    %vm69 = vcmask 23552
    %v70 = vsel %vm69, %v67, 0.0
    %71 = vadd.xlane.f32.xlu0 %v70
    %v72 = vpop.xlane.xlu0 %71
    %v73 = vsel %vm69, %v68, 0.0
    %74 = vadd.xlane.f32.xlu0 %v73
    %v75 = vpop.xlane.xlu0 %74
    %vm76 = vcmask 7168
    %77 = vst.msk [vmem:[#allocation2] sm:$0xff] %vm76, %v72
    %78 = vst.msk [vmem:[#allocation2 + $0x8] sm:$0xff] %vm76, %v75
    %v79 = vperm.slane %v65, 0
    %v80 = vmul.f32 %v62, %v79
    %v81 = vmul.f32 %v63, %v79
    %v82 = vsel %vm69, %v80, 0.0
    %83 = vadd.xlane.f32.xlu0 %v82
    %v84 = vpop.xlane.xlu0 %83
    %v85 = vsel %vm69, %v81, 0.0
    %86 = vadd.xlane.f32.xlu0 %v85
    %v87 = vpop.xlane.xlu0 %86
    %88 = vst.msk [vmem:[#allocation3] sm:$0xff] %vm76, %v84
    %89 = vst.msk [vmem:[#allocation3 + $0x8] sm:$0xff] %vm76, %v87
    %v90 = vld [vmem:[%s6] sm:$0x1]
    %v92 = vperm.slane %v90, 0
    %v94 = vld [vmem:[%s5] sm:$0x1]
    %96 = vset.pattern.permute.xlu0 0
    %97 = vperm.xlu0 %96, %v62
    %v98 = vpop.permute.xlu0 %97
    %101 = vset.pattern.permute.xlu0 0
    %102 = vperm.xlu0 %101, %v63
    %v103 = vpop.permute.xlu0 %102
    %v105 = vperm.slane %v94, 0
    %v106 = vmul.f32 %v98, %v105
    %v107 = vmul.f32 %v103, %v105
    %v108 = vadd.f32 %v92, %v106
    %v109 = vadd.f32 %v92, %v107
    %v110 = vld [vmem:[%s5 + $0x1] sm:$0x1]
    %111 = vset.pattern.permute.xlu0 1
    %112 = vperm.xlu0 %111, %v62
    %v113 = vpop.permute.xlu0 %112
    %115 = vset.pattern.permute.xlu0 1
    %116 = vperm.xlu0 %115, %v63
    %v117 = vpop.permute.xlu0 %116
    %v119 = vperm.slane %v110, 0
    %v120 = vmul.f32 %v113, %v119
    %v121 = vmul.f32 %v117, %v119
    %v122 = vadd.f32 %v108, %v120
    %v123 = vadd.f32 %v109, %v121
    %v124 = vld [vmem:[%s5 + $0x2] sm:$0x1]
    %125 = vset.pattern.permute.xlu0 2
    %126 = vperm.xlu0 %125, %v62
    %v127 = vpop.permute.xlu0 %126
    %129 = vset.pattern.permute.xlu0 2
    %130 = vperm.xlu0 %129, %v63
    %v131 = vpop.permute.xlu0 %130
    %v133 = vperm.slane %v124, 0
    %v134 = vmul.f32 %v127, %v133
    %v135 = vmul.f32 %v131, %v133
    %v136 = vadd.f32 %v122, %v134
    %v137 = vadd.f32 %v123, %v135
    %138 = vst.msk [vmem:[#allocation4] sm:$0xff] %vm69, %v136
    %139 = vst.msk [vmem:[#allocation4 + $0x8] sm:$0xff] %vm69, %v137
    %140 = vst.msk [vmem:[#allocation6] sm:$0xff] %vm76, 0.0
    %141 = vst.msk [vmem:[#allocation6 + $0x8] sm:$0xff] %vm76, 0.0
    %142 = vst.msk [vmem:[#allocation8] sm:$0xff] %vm69, 0.0
    %143 = vst.msk [vmem:[#allocation8 + $0x8] sm:$0xff] %vm69, 0.0
    loop: start=0, step=1, limit=32
    $region42: #{tpu_custom_call.1} parent=1 // loop_pre_header
      _
    $region43: #{tpu_custom_call.1} parent=1 // loop_header
      %s145 = sphi 0, %s149
      %p146 = scmp.ge.s32.totalorder %s145, 32
    $region44: #{tpu_custom_call.1} parent=1 // loop_header_branch
      %148 = sbr.rel (%p146) target = $region48
    $region45: #{tpu_custom_call.1} parent=1 // loop_body
      %s150 = sld [smem:[#allocation9 + %s145]]
      %s151 = sld [smem:[#allocation11 + %s145]]
      %s152 = scalar_lea.vmem [#allocation2], %s150
      %v153 = vld [vmem:[%s152] sm:$0x1]
      %s154 = scalar_lea.vmem [#allocation3], %s151
      %v155 = vld [vmem:[%s154] sm:$0x1]
      %v156 = vadd.f32 %v153, %v155
      %v157 = vtanh.pop %v156
      %s158 = scalar_lea.vmem [#allocation5], %s145
      %vm159 = vcmask 0
      %160 = vst.msk [vmem:[%s158] sm:$0x1] %vm159, %v157
      %s161 = scalar_lea.vmem [#allocation6], %s150
      %v162 = vld [vmem:[%s161] sm:$0x1]
      %v163 = vmul.f32 %v157, %v157
      %v164 = vadd.f32 %v162, %v163
      %165 = vst.msk [vmem:[%s161] sm:$0x1] %vm159, %v164
    $region46: #{tpu_custom_call.1} parent=1 // loop_footer
      %s149 = sadd.s32 1, %s145
    $region47: #{tpu_custom_call.1} parent=1 // loop_footer_branch
      %144 = sbr.rel target = $region43
    $region48: #{tpu_custom_call.1} parent=1 // loop_exit
      _
    %v166 = vld [vmem:[#allocation6] sm:$0xff]
    %v167 = vld [vmem:[#allocation6 + $0x8] sm:$0xff]
    %v168 = vadd.f32 %v166, 1.0
    %v169 = vadd.f32 %v167, 1.0
    %v170 = vrsqrt.pop %v168
    %v171 = vmul.f32 %v170, %v168
    %v172 = vmul.f32 %v171, %v170
    %v173 = vmul.f32 0.5, %v172
    %v174 = vsub.f32 1.5, %v173
    %v175 = vmul.f32 %v170, %v174
    %vm176 = vweird.f32 %v168
    %vm177 = vweird.f32 %v170
    %vm178 = vmor %vm176, %vm177
    %v179 = vsel %vm178, %v170, %v175
    %v180 = vrsqrt.pop %v169
    %v181 = vmul.f32 %v180, %v169
    %v182 = vmul.f32 %v181, %v180
    %v183 = vmul.f32 0.5, %v182
    %v184 = vsub.f32 1.5, %v183
    %v185 = vmul.f32 %v180, %v184
    %vm186 = vweird.f32 %v169
    %vm187 = vweird.f32 %v180
    %vm188 = vmor %vm186, %vm187
    %v189 = vsel %vm188, %v180, %v185
    %190 = vst.msk [vmem:[#allocation7] sm:$0xff] %vm76, %v179
    %191 = vst.msk [vmem:[#allocation7 + $0x8] sm:$0xff] %vm76, %v189
    loop: start=0, step=1, limit=32
    $region49: #{tpu_custom_call.1} parent=1 // loop_pre_header
      _
    $region50: #{tpu_custom_call.1} parent=1 // loop_header
      %s193 = sphi 0, %s197
      %p194 = scmp.ge.s32.totalorder %s193, 32
    $region51: #{tpu_custom_call.1} parent=1 // loop_header_branch
      %196 = sbr.rel (%p194) target = $region55
    $region52: #{tpu_custom_call.1} parent=1 // loop_body
      %s198 = sld [smem:[#allocation9 + %s193]]
      %s199 = sld [smem:[#allocation11 + %s193]]
      %s200 = sld [smem:[#allocation13 + %s193]]
      %s201 = scalar_lea.vmem [#allocation5], %s193
      %v202 = vld [vmem:[%s201] sm:$0x1]
      %s203 = scalar_lea.vmem [#allocation5], %s200
      %v204 = vld [vmem:[%s203] sm:$0x1]
      %s205 = scalar_lea.vmem [#allocation7], %s198
      %v206 = vld [vmem:[%s205] sm:$0x1]
      %v207 = vmul.f32 %v202, %v204
      %v208 = vmul.f32 %v206, %v207
      %s209 = scalar_lea.vmem [#allocation7], %s199
      %v210 = vld [vmem:[%s209] sm:$0x1]
      %v211 = vmul.f32 %v208, %v210
      %s212 = scalar_lea.vmem [#allocation8], %s198
      %v213 = vld [vmem:[%s212] sm:$0x1]
      %s214 = scalar_lea.vmem [#allocation4], %s199
      %v215 = vld [vmem:[%s214] sm:$0x1]
      %217 = vset.pattern.permute.xlu0 0
      %218 = vperm.xlu0 %217, %v211
      %v219 = vpop.permute.xlu0 %218
      %v221 = vmul.f32 %v219, %v215
      %v222 = vadd.f32 %v213, %v221
      %vm223 = vcmask 16384
      %224 = vst.msk [vmem:[%s212] sm:$0x1] %vm223, %v222
    $region53: #{tpu_custom_call.1} parent=1 // loop_footer
      %s197 = sadd.s32 1, %s193
    $region54: #{tpu_custom_call.1} parent=1 // loop_footer_branch
      %192 = sbr.rel target = $region50
    $region55: #{tpu_custom_call.1} parent=1 // loop_exit
      _
    %v225 = vld [vmem:[#allocation7] sm:$0xff]
    %v226 = vld [vmem:[#allocation7 + $0x8] sm:$0xff]
    %v227 = vld [vmem:[#allocation6] sm:$0xff]
    %v228 = vld [vmem:[#allocation6 + $0x8] sm:$0xff]
    %v229 = vmul.f32 %v225, %v227
    %v230 = vmul.f32 %v226, %v228
    %v231 = vmul.f32 %v229, %v225
    %v232 = vmul.f32 %v230, %v226
    %v233 = vld [vmem:[#allocation4] sm:$0xff]
    %v234 = vld [vmem:[#allocation4 + $0x8] sm:$0xff]
    %236 = vset.pattern.permute.xlu0 0
    %237 = vperm.xlu0 %236, %v231
    %v238 = vpop.permute.xlu0 %237
    %241 = vset.pattern.permute.xlu0 0
    %242 = vperm.xlu0 %241, %v232
    %v243 = vpop.permute.xlu0 %242
    %v245 = vmul.f32 %v238, %v233
    %v246 = vmul.f32 %v243, %v234
    %v247 = vsub.f32 %v62, %v245
    %v248 = vsub.f32 %v63, %v246
    %v249 = vld [vmem:[#allocation8] sm:$0xff]
    %v250 = vld [vmem:[#allocation8 + $0x8] sm:$0xff]
    %v251 = vadd.f32 %v247, %v249
    %v252 = vadd.f32 %v248, %v250
    %253 = vst.msk [vmem:[%s7] sm:$0xff] %vm69, %v251
    %254 = vst.msk [vmem:[%s7 + $0x8] sm:$0xff] %vm69, %v252
    // Predicated region
    $region56: #{tpu_custom_call.1} parent=1 // pred_check
      _
    $region57: #{tpu_custom_call.1} parent=1 // pred_check_branch
      %256 = sbr.rel (0) target = $region59
    $region58: #{tpu_custom_call.1} parent=1 // pred_region
      _
    $region59: #{tpu_custom_call.1} parent=1 // pred_fallthru
      _
    // Predicated region
    $region60: #{tpu_custom_call.1} parent=1 // pred_check
      _
    $region61: #{tpu_custom_call.1} parent=1 // pred_check_branch
      %258 = sbr.rel (0) target = $region63
    $region62: #{tpu_custom_call.1} parent=1 // pred_region
      _
    $region63: #{tpu_custom_call.1} parent=1 // pred_fallthru
      _
    %259 = vsyncpa [#allocation10], 1
    %260 = vsyncpa [#allocation12], 1

</llo_original>
